<compile_context>
chip_gen: v5e
topology: v5e:2x2
jax: 0.10.0
libtpu: 0.0.40
codegen_flags: <defaults>
</compile_context>

<pallas_src>
import functools

import jax
import jax.numpy as jnp
from jax.experimental import pallas as pl
from jax.experimental.pallas import tpu as pltpu

_LANE = 128
_TARGET_TILE_M = 1024  # 512-1024 hits ~85% of HBM roofline per measured data.


def _round_up(x, m):
    return (x + m - 1) // m * m


def _fused_mlp_kernel(x_ref, *refs, n_layers):
    """Whole MLP on one batch tile.

    refs = (w0, b0, w1, b1, ..., w_{L-1}, b_{L-1}, o_ref).
    Hidden-layer weights are bf16 [K_pad, N_pad], biases f32 [1, N_pad]; the
    last layer is stored as its single real column, a bf16 [1, H_pad] row plus
    a [1, 1] f32 bias, and is evaluated as a VPU multiply + lane reduction.
    """
    o_ref = refs[-1]
    wb = refs[:-1]

    z = x_ref[...]  # bf16 (tile_m, K) straight from HBM, no in-kernel cast.
    for i in range(n_layers - 1):
        w = wb[2 * i][...]
        b = wb[2 * i + 1][...]
        y = jnp.dot(z, w, preferred_element_type=jnp.float32) + b
        z = jnp.maximum(y, 0.0).astype(jnp.bfloat16)

    # Final Linear(h_last, 1): out[m] = sum_h z[m, h] * w[h] + b.
    w_row = wb[2 * (n_layers - 1)][...].astype(jnp.float32)      # (1, H_pad)
    b_last = wb[2 * (n_layers - 1) + 1][...]                     # (1, 1)
    y = jnp.sum(z.astype(jnp.float32) * w_row, axis=-1, keepdims=True) + b_last
    o_ref[...] = y.astype(o_ref.dtype)


def init_discriminator_params(key, in_dim, h_dims):
    """Mimics torch.nn.Linear default init (U[-1/sqrt(fan_in), +1/sqrt(fan_in)]).

    Weights stored as [in_features, out_features] (transpose of PyTorch's
    [out, in]) so each layer is y = x @ W + b.
    """
    dims = [in_dim] + list(h_dims) + [1]
    params = []
    for i in range(len(dims) - 1):
        fan_in, fan_out = dims[i], dims[i + 1]
        key, kw, kb = jax.random.split(key, 3)
        bound = 1.0 / jnp.sqrt(float(fan_in))
        w = jax.random.uniform(kw, (fan_in, fan_out), jnp.float32, -bound, bound)
        b = jax.random.uniform(kb, (fan_out,), jnp.float32, -bound, bound)
        params.append((w, b))
    return params


def prepare_discriminator_params(params):
    """One-time prep of the kernel-side parameter layout.

    * First layer keeps its real in_dim on the contraction axis (x is not
      feature-padded); hidden dims are lane-padded to multiples of 128.
    * Hidden weights are cast to bf16 (MXU-native), biases stay f32.
    * The last Linear(h_last, 1) is stored as its single real weight column,
      zero-padded into a lane-dense bf16 [1, H_pad] row, plus a [1, 1] bias.
    Zero padding is exact: padded hidden lanes get zero weight columns + zero
    bias, stay exactly 0 through ReLU, and meet zero weights downstream.
    """
    n_layers = len(params)
    prepared = []
    for idx, (w, b) in enumerate(params):
        k, n = w.shape
        kp = k if idx == 0 else _round_up(k, _LANE)
        if idx == n_layers - 1:
            w_p = (jnp.zeros((1, kp), jnp.float32).at[0, :k].set(w[:, 0])
                   .astype(jnp.bfloat16))
            b_p = jnp.asarray(b, jnp.float32).reshape(1, 1)
        else:
            np_ = _round_up(n, _LANE)
            w_p = (jnp.zeros((kp, np_), jnp.float32).at[:k, :n].set(w)
                   .astype(jnp.bfloat16))
            b_p = jnp.zeros((1, np_), jnp.float32).at[:, :n].set(b.reshape(1, n))
        prepared.append((w_p, b_p))
    return prepared


@jax.jit
def discriminator_forward(prepared_params, x):
    """Matches Discriminator.forward: ReLU on all but last layer, no sigmoid.

    Note: matmuls use bf16 operands with f32 accumulation, so logits differ
    from a pure-f32 PyTorch reference at roughly the 1e-2 relative level.
    """
    M, K = x.shape
    n_layers = len(prepared_params)

    # Batch tile: large enough to amortize the ~0.35 us per-grid-step overhead,
    # multiple of 16 (bf16 sublane packing), and >=2 grid steps when the batch
    # exceeds one tile so both v7x TensorCores get work.
    if M <= _TARGET_TILE_M:
        tile_m = _round_up(max(M, 1), 16)
    else:
        tile_m = min(_TARGET_TILE_M, _round_up(-(-M // 2), 16))
    mp = _round_up(M, tile_m)
    grid_m = mp // tile_m

    # Single wrapper pass: cast x to bf16 (halves the kernel's HBM read) fused
    # with the batch-edge zero pad. Feature dim stays unpadded.
    xb = x.astype(jnp.bfloat16)
    if mp != M:
        xb = jnp.pad(xb, ((0, mp - M), (0, 0)))

    wb_inputs = []
    wb_specs = []
    flops = 0
    resident_bytes = 0
    for idx, (w, b) in enumerate(prepared_params):
        wb_inputs += [w, b]
        wb_specs += [
            pl.BlockSpec(w.shape, lambda i: (0, 0)),  # full weight, resident
            pl.BlockSpec(b.shape, lambda i: (0, 0)),  # bias row, resident
        ]
        resident_bytes += w.size * w.dtype.itemsize + b.size * b.dtype.itemsize
        if idx < n_layers - 1:
            flops += 2 * mp * w.shape[0] * w.shape[1]
        else:
            flops += 2 * mp * w.shape[1]
    bytes_accessed = xb.size * 2 + mp * 4 + resident_bytes

    # Only raise the scoped VMEM limit when big h_dims actually need it
    # (keeps the same kernel safe across v5e/v6e 128 MiB and v7x 64 MiB VMEM).
    max_h = max(w.shape[1] for w, _ in prepared_params)
    vmem_needed = (2 * resident_bytes          # conservatively double-buffered
                   + 2 * tile_m * K * 2        # x tiles (bf16)
                   + 2 * tile_m * 4            # out tiles (f32)
                   + 6 * tile_m * max_h * 4)   # live-activation headroom
    cp_kwargs = dict(dimension_semantics=("parallel",))
    if vmem_needed > (24 << 20):
        cp_kwargs["vmem_limit_bytes"] = min(int(vmem_needed), 64 << 20)

    out = pl.pallas_call(
        functools.partial(_fused_mlp_kernel, n_layers=n_layers),
        out_shape=jax.ShapeDtypeStruct((mp, 1), jnp.float32),
        grid=(grid_m,),
        in_specs=[pl.BlockSpec((tile_m, K), lambda i: (i, 0))] + wb_specs,
        out_specs=pl.BlockSpec((tile_m, 1), lambda i: (i, 0)),
        compiler_params=pltpu.CompilerParams(**cp_kwargs),
        cost_estimate=pl.CostEstimate(
            flops=flops, transcendentals=0, bytes_accessed=bytes_accessed),
    )(xb, *wb_inputs)

    # Drop the zero-padded batch rows (contiguous slice, no strided re-read).
    return out[:M, :]


def discriminator_reference(params, x, *, bf16_matmul=False):
    """Pure-JAX reference. bf16_matmul=True mirrors the kernel's MXU math."""
    z = x
    for i, (w, b) in enumerate(params):
        if bf16_matmul:
            z = jnp.dot(z.astype(jnp.bfloat16), w.astype(jnp.bfloat16),
                        preferred_element_type=jnp.float32) + b
        else:
            z = z @ w + b
        if i != len(params) - 1:
            z = jnp.maximum(z, 0.0)
    return z


if __name__ == "__main__":
    key = jax.random.PRNGKey(0)
    batch, in_dim = 2, 16
    h_dims = [32, 32]

    k_params, k_x, k_x2 = jax.random.split(key, 3)
    params = init_discriminator_params(k_params, in_dim, h_dims)
    prepared = prepare_discriminator_params(params)

    # Small case (single tile).
    x = jax.random.normal(k_x, (batch, in_dim), jnp.float32)
    out = jax.block_until_ready(discriminator_forward(prepared, x))
    ref_bf16 = discriminator_reference(params, x, bf16_matmul=True)
    ref_f32 = discriminator_reference(params, x, bf16_matmul=False)
    assert out.shape == (batch, 1), out.shape
    # Exact-math check against a bf16-matmul/f32-accumulate reference.
    assert jnp.allclose(out, ref_bf16, atol=1e-3, rtol=1e-3), (out, ref_bf16)
    # Loose check against the fp32 PyTorch-equivalent reference (bf16 operands).
    assert jnp.allclose(out, ref_f32, atol=5e-2, rtol=5e-2), (out, ref_f32)

    # Larger case: exercises the multi-step "parallel" grid + batch edge pad.
    x2 = jax.random.normal(k_x2, (1300, in_dim), jnp.float32)
    out2 = jax.block_until_ready(discriminator_forward(prepared, x2))
    ref2 = discriminator_reference(params, x2, bf16_matmul=True)
    assert out2.shape == (1300, 1), out2.shape
    assert jnp.allclose(out2, ref2, atol=1e-3, rtol=1e-3)

    print("KERNEL_OK")
</pallas_src>

<mosaic_0001>
module attributes {stable_mosaic.version = 11 : i64} {
  func.func @_fused_mlp_kernel(%arg0: i32, %arg1: memref<16x16xbf16, #tpu.memory_space<vmem>>, %arg2: memref<16x128xbf16, #tpu.memory_space<vmem>>, %arg3: memref<1x128xf32, #tpu.memory_space<vmem>>, %arg4: memref<128x128xbf16, #tpu.memory_space<vmem>>, %arg5: memref<1x128xf32, #tpu.memory_space<vmem>>, %arg6: memref<1x128xbf16, #tpu.memory_space<vmem>>, %arg7: memref<1x1xf32, #tpu.memory_space<vmem>>, %arg8: memref<16x1xf32, #tpu.memory_space<vmem>>) attributes {dimension_semantics = [#tpu.dimension_semantics<parallel>], iteration_bounds = array<i64: 1>, scalar_prefetch = 0 : i64, scratch_operands = 0 : i64, tpu.core_type = #tpu.core_type<tc>, window_params = [{transform_indices = @transform_0, window_bounds = array<i64: 16, 16>}, {pipeline_mode = #tpu.pipeline_mode<synchronous>, transform_indices = @transform_1, window_bounds = array<i64: 16, 128>}, {pipeline_mode = #tpu.pipeline_mode<synchronous>, transform_indices = @transform_2, window_bounds = array<i64: 1, 128>}, {pipeline_mode = #tpu.pipeline_mode<synchronous>, transform_indices = @transform_3, window_bounds = array<i64: 128, 128>}, {pipeline_mode = #tpu.pipeline_mode<synchronous>, transform_indices = @transform_4, window_bounds = array<i64: 1, 128>}, {pipeline_mode = #tpu.pipeline_mode<synchronous>, transform_indices = @transform_5, window_bounds = array<i64: 1, 128>}, {pipeline_mode = #tpu.pipeline_mode<synchronous>, transform_indices = @transform_6, window_bounds = array<i64: 1, 1>}, {transform_indices = @transform_7, window_bounds = array<i64: 16, 1>}]} {
    %c0 = arith.constant 0 : index
    %c0_0 = arith.constant 0 : index
    %0 = vector.load %arg1[%c0, %c0_0] : memref<16x16xbf16, #tpu.memory_space<vmem>>, vector<16x16xbf16>
    %c0_1 = arith.constant 0 : index
    %c0_2 = arith.constant 0 : index
    %1 = vector.load %arg2[%c0_1, %c0_2] : memref<16x128xbf16, #tpu.memory_space<vmem>>, vector<16x128xbf16>
    %c0_3 = arith.constant 0 : index
    %c0_4 = arith.constant 0 : index
    %2 = vector.load %arg3[%c0_3, %c0_4] : memref<1x128xf32, #tpu.memory_space<vmem>>, vector<1x128xf32>
    %cst = arith.constant dense<0.000000e+00> : vector<16x128xf32>
    %3 = tpu.matmul %0, %1, %cst {dimension_numbers = #tpu.dot_dimension_numbers<[1], [0], [0], [1], [0, 0, 1, 1], [], []>} : vector<16x16xbf16>, vector<16x128xbf16>, vector<16x128xf32> -> vector<16x128xf32>
    %4 = vector.broadcast %2 : vector<1x128xf32> to vector<16x128xf32>
    %5 = arith.addf %3, %4 : vector<16x128xf32>
    %cst_5 = arith.constant 0.000000e+00 : f32
    %6 = vector.broadcast %cst_5 : f32 to vector<16x128xf32>
    %7 = arith.maximumf %5, %6 : vector<16x128xf32>
    %8 = arith.truncf %7 : vector<16x128xf32> to vector<16x128xbf16>
    %c0_6 = arith.constant 0 : index
    %c0_7 = arith.constant 0 : index
    %9 = vector.load %arg4[%c0_6, %c0_7] : memref<128x128xbf16, #tpu.memory_space<vmem>>, vector<128x128xbf16>
    %c0_8 = arith.constant 0 : index
    %c0_9 = arith.constant 0 : index
    %10 = vector.load %arg5[%c0_8, %c0_9] : memref<1x128xf32, #tpu.memory_space<vmem>>, vector<1x128xf32>
    %cst_10 = arith.constant dense<0.000000e+00> : vector<16x128xf32>
    %11 = tpu.matmul %8, %9, %cst_10 {dimension_numbers = #tpu.dot_dimension_numbers<[1], [0], [0], [1], [0, 0, 1, 1], [], []>} : vector<16x128xbf16>, vector<128x128xbf16>, vector<16x128xf32> -> vector<16x128xf32>
    %12 = vector.broadcast %10 : vector<1x128xf32> to vector<16x128xf32>
    %13 = arith.addf %11, %12 : vector<16x128xf32>
    %cst_11 = arith.constant 0.000000e+00 : f32
    %14 = vector.broadcast %cst_11 : f32 to vector<16x128xf32>
    %15 = arith.maximumf %13, %14 : vector<16x128xf32>
    %16 = arith.truncf %15 : vector<16x128xf32> to vector<16x128xbf16>
    %c0_12 = arith.constant 0 : index
    %c0_13 = arith.constant 0 : index
    %17 = vector.load %arg6[%c0_12, %c0_13] : memref<1x128xbf16, #tpu.memory_space<vmem>>, vector<1x128xbf16>
    %18 = arith.extf %17 : vector<1x128xbf16> to vector<1x128xf32>
    %c0_14 = arith.constant 0 : index
    %c0_15 = arith.constant 0 : index
    %19 = vector.load %arg7[%c0_14, %c0_15] : memref<1x1xf32, #tpu.memory_space<vmem>>, vector<1x1xf32>
    %20 = arith.extf %16 : vector<16x128xbf16> to vector<16x128xf32>
    %21 = vector.broadcast %18 : vector<1x128xf32> to vector<16x128xf32>
    %22 = arith.mulf %20, %21 : vector<16x128xf32>
    %cst_16 = arith.constant dense<0.000000e+00> : vector<16xf32>
    %23 = vector.multi_reduction <add>, %22, %cst_16 [1] : vector<16x128xf32> to vector<16xf32>
    %24 = vector.shape_cast %23 : vector<16xf32> to vector<16x1xf32>
    %25 = vector.broadcast %19 : vector<1x1xf32> to vector<16x1xf32>
    %26 = arith.addf %24, %25 : vector<16x1xf32>
    %c0_17 = arith.constant 0 : index
    %c0_18 = arith.constant 0 : index
    %27 = vector.load %arg8[%c0_17, %c0_18] : memref<16x1xf32, #tpu.memory_space<vmem>>, vector<16x1xf32>
    tpu.vector_store %arg8[%c0_17, %c0_18], %26 {strides = array<i32>} : memref<16x1xf32, #tpu.memory_space<vmem>>, vector<16x1xf32>,
    return
  }
  func.func @transform_0(%arg0: i32) -> (i32, i32) {
    %c0_i32 = arith.constant 0 : i32
    %c0_i32_0 = arith.constant 0 : i32
    return %arg0, %c0_i32 : i32, i32
  }
  func.func @transform_1(%arg0: i32) -> (i32, i32) {
    %c0_i32 = arith.constant 0 : i32
    %c0_i32_0 = arith.constant 0 : i32
    %c0_i32_1 = arith.constant 0 : i32
    return %c0_i32, %c0_i32_0 : i32, i32
  }
  func.func @transform_2(%arg0: i32) -> (i32, i32) {
    %c0_i32 = arith.constant 0 : i32
    %c0_i32_0 = arith.constant 0 : i32
    %c0_i32_1 = arith.constant 0 : i32
    return %c0_i32, %c0_i32_0 : i32, i32
  }
  func.func @transform_3(%arg0: i32) -> (i32, i32) {
    %c0_i32 = arith.constant 0 : i32
    %c0_i32_0 = arith.constant 0 : i32
    %c0_i32_1 = arith.constant 0 : i32
    return %c0_i32, %c0_i32_0 : i32, i32
  }
  func.func @transform_4(%arg0: i32) -> (i32, i32) {
    %c0_i32 = arith.constant 0 : i32
    %c0_i32_0 = arith.constant 0 : i32
    %c0_i32_1 = arith.constant 0 : i32
    return %c0_i32, %c0_i32_0 : i32, i32
  }
  func.func @transform_5(%arg0: i32) -> (i32, i32) {
    %c0_i32 = arith.constant 0 : i32
    %c0_i32_0 = arith.constant 0 : i32
    %c0_i32_1 = arith.constant 0 : i32
    return %c0_i32, %c0_i32_0 : i32, i32
  }
  func.func @transform_6(%arg0: i32) -> (i32, i32) {
    %c0_i32 = arith.constant 0 : i32
    %c0_i32_0 = arith.constant 0 : i32
    %c0_i32_1 = arith.constant 0 : i32
    return %c0_i32, %c0_i32_0 : i32, i32
  }
  func.func @transform_7(%arg0: i32) -> (i32, i32) {
    %c0_i32 = arith.constant 0 : i32
    %c0_i32_0 = arith.constant 0 : i32
    return %arg0, %c0_i32 : i32, i32
  }
}

</mosaic_0001>

<llo_original>
// kernel: discriminator_forward.1
$region0: #{discriminator_forward.1}
  #allocation0 [shape = 'u32[]', space=smem, size = 0x4, offset = 0x4, fixed_abs, tag = 'smem constant byte address 0x4 - core index']
  #allocation1 [shape = 'u32[72,128]{1,0:T(1,128)}', space=vmem, size = 0x9000, scoped, tag = 'internal scratch']
  #allocation2 [shape = 'f32[1,1]{1,0:T(1,128)S(1)}', space=vmem, size = 0x200, scoped, tag = 'scoped memory for discriminator_forward.1']
  %s0 = inlined_call_operand.vmem [shape: bf16[16,16], index: 0, kind: input, shape index: {}]
  %s1 = inlined_call_operand.vmem [shape: bf16[16,128], index: 1, kind: input, shape index: {}]
  %s2 = inlined_call_operand.vmem [shape: f32[1,128], index: 2, kind: input, shape index: {}]
  %s3 = inlined_call_operand.hbm [shape: bf16[128,128], index: 3, kind: input, shape index: {}]
  %s4 = inlined_call_operand.vmem [shape: f32[1,128], index: 4, kind: input, shape index: {}]
  %s5 = inlined_call_operand.vmem [shape: bf16[1,128], index: 5, kind: input, shape index: {}]
  %s6 = inlined_call_operand.<no memory space> [shape: f32[1,1], index: 6, kind: input, shape index: {}]
  %s7 = inlined_call_operand.vmem [shape: f32[16,1], index: 7, kind: output, shape index: {}]
  %s8 = sld [smem:[#allocation0]]
  $region42: #{discriminator_forward.1} parent=0
    _
  %s10 = ssub.s32 1, %s8
  %s11 = scalar_select 0, %s10, %s8
  %v12 = vstv %s6
  %13 = vst [vmem:[#allocation2] sm:$0x1] %v12
  $region1: #{discriminator_forward.1} parent=0
    #allocation3 [shape = 'u8[32768]{0}', space=vmem, size = 0x8000, scoped, tag = 'input window, operand 3, single buffered']
    #allocation4 [shape = 's32[1]{0}', space=sflag, size = 0x4, scoped, tag = 'scoped memory for discriminator_forward.1']
    %14 = vsyncpa [#allocation4], 0
    // Predicated region
    $region2: #{discriminator_forward.1} parent=1 // pred_check
      _
    $region3: #{discriminator_forward.1} parent=1 // pred_check_branch
      %16 = sbr.rel (0) target = $region5
    $region4: #{discriminator_forward.1} parent=1 // pred_region
      _
    $region5: #{discriminator_forward.1} parent=1 // pred_fallthru
      _
    // Predicated region
    $region6: #{discriminator_forward.1} parent=1 // pred_check
      _
    $region7: #{discriminator_forward.1} parent=1 // pred_check_branch
      %18 = sbr.rel (0) target = $region9
    $region8: #{discriminator_forward.1} parent=1 // pred_region
      _
    $region9: #{discriminator_forward.1} parent=1 // pred_fallthru
      _
    // Predicated region
    $region10: #{discriminator_forward.1} parent=1 // pred_check
      _
    $region11: #{discriminator_forward.1} parent=1 // pred_check_branch
      %20 = sbr.rel (0) target = $region13
    $region12: #{discriminator_forward.1} parent=1 // pred_region
      _
    $region13: #{discriminator_forward.1} parent=1 // pred_fallthru
      _
    // Predicated region
    $region14: #{discriminator_forward.1} parent=1 // pred_check
      _
    $region15: #{discriminator_forward.1} parent=1 // pred_check_branch
      %22 = sbr.rel (0) target = $region17
    $region16: #{discriminator_forward.1} parent=1 // pred_region
      %24 = vsyncadd [#allocation4], 0
      %s25 = sshll.u32 %s3, 4
      %s26 = int_to_ptr.hbm [resolvable:$true] %s25
      %s27 = sshll.u32 [#allocation3], 4
      %s28 = int_to_ptr.vmem [resolvable:$true] %s27
      %33 = dma.hbm_to_vmem [thread:$0]  %s26, 1024, %s28, [#allocation4], 64, 64, 4
    $region17: #{discriminator_forward.1} parent=1 // pred_fallthru
      _
    // Predicated region
    $region18: #{discriminator_forward.1} parent=1 // pred_check
      _
    $region19: #{discriminator_forward.1} parent=1 // pred_check_branch
      %35 = sbr.rel (0) target = $region21
    $region20: #{discriminator_forward.1} parent=1 // pred_region
      _
    $region21: #{discriminator_forward.1} parent=1 // pred_fallthru
      _
    // Predicated region
    $region22: #{discriminator_forward.1} parent=1 // pred_check
      _
    $region23: #{discriminator_forward.1} parent=1 // pred_check_branch
      %37 = sbr.rel (0) target = $region25
    $region24: #{discriminator_forward.1} parent=1 // pred_region
      _
    $region25: #{discriminator_forward.1} parent=1 // pred_fallthru
      _
    // Predicated region
    $region26: #{discriminator_forward.1} parent=1 // pred_check
      _
    $region27: #{discriminator_forward.1} parent=1 // pred_check_branch
      %39 = sbr.rel (0) target = $region29
    $region28: #{discriminator_forward.1} parent=1 // pred_region
      _
    $region29: #{discriminator_forward.1} parent=1 // pred_fallthru
      _
    // Predicated region
    $region30: #{discriminator_forward.1} parent=1 // pred_check
      _
    $region31: #{discriminator_forward.1} parent=1 // pred_check_branch
      %41 = sbr.rel (0) target = $region33
    $region32: #{discriminator_forward.1} parent=1 // pred_region
      %43 = dma.done [#allocation4], 1024
    $region33: #{discriminator_forward.1} parent=1 // pred_fallthru
      _
    %v45 = vld [vmem:[%s0] sm:$0xf]
    %v46 = vld [vmem:[%s0 + $0x4] sm:$0xf]
    %v47 = vld [vmem:[%s1] sm:$0xf]
    %v48 = vld [vmem:[%s1 + $0x4] sm:$0xf]
    %v49 = vld [vmem:[%s2] sm:$0x1]
    %v51 = vperm.slane %v49, 0
    %v55 = vunpack.c.l.b16 %v45
    %v56 = vunpack.c.l.b16 %v46
    %v57 = vpack.c.b16 %v56, %v55
    %v60 = vunpack.c.l.b16 %v47
    %v61 = vunpack.c.l.b16 %v48
    %v62 = vpack.c.b16 %v61, %v60
    %vm64 = vcmask 130048
    %v66 = vsel %vm64, %v57, 0
    %68 = vmatpush.bf16.msra.mxu0 0
    %69 = vmatpush.bf16.msra.mxu0 0
    %70 = vmatpush.bf16.msra.mxu0 0
    %71 = vmatpush.bf16.msra.mxu0 0
    %72 = vmatpush.bf16.msra.mxu0 0
    %73 = vmatpush.bf16.msra.mxu0 0
    %74 = vmatpush.bf16.msra.mxu0 0
    %75 = vmatpush.bf16.msra.mxu0 %v62
    %76 = vmatmul.bf16.gmra.mxu0 %v66
    %v77 = vpop.f32.mrf.mxu0
    %v78 = vadd.f32 %v51, %v77
    %v79 = vpop.f32.mrf.mxu0
    %v80 = vadd.f32 %v51, %v79
    %81 = vdwg.mxu0
    %v82 = vmax.f32 %v78, 0.0
    %v83 = vmax.f32 %v80, 0.0
    %v84 = vpack.c.bf16 %v83, %v82
    %v85 = vld [vmem:[#allocation3] sm:$0xf]
    %v86 = vld [vmem:[#allocation3 + $0x4] sm:$0xf]
    %v87 = vld [vmem:[#allocation3 + $0x8] sm:$0xf]
    %v88 = vld [vmem:[#allocation3 + $0xc] sm:$0xf]
    %v89 = vld [vmem:[#allocation3 + $0x10] sm:$0xf]
    %v90 = vld [vmem:[#allocation3 + $0x14] sm:$0xf]
    %v91 = vld [vmem:[#allocation3 + $0x18] sm:$0xf]
    %v92 = vld [vmem:[#allocation3 + $0x1c] sm:$0xf]
    %v93 = vld [vmem:[#allocation3 + $0x20] sm:$0xf]
    %v94 = vld [vmem:[#allocation3 + $0x24] sm:$0xf]
    %v95 = vld [vmem:[#allocation3 + $0x28] sm:$0xf]
    %v96 = vld [vmem:[#allocation3 + $0x2c] sm:$0xf]
    %v97 = vld [vmem:[#allocation3 + $0x30] sm:$0xf]
    %v98 = vld [vmem:[#allocation3 + $0x34] sm:$0xf]
    %v99 = vld [vmem:[#allocation3 + $0x38] sm:$0xf]
    %v100 = vld [vmem:[#allocation3 + $0x3c] sm:$0xf]
    %v101 = vld [vmem:[%s4] sm:$0x1]
    %v103 = vperm.slane %v101, 0
    %v121 = vunpack.c.l.b16 %v85
    %v122 = vunpack.c.l.b16 %v86
    %v123 = vunpack.c.l.b16 %v87
    %v124 = vunpack.c.l.b16 %v88
    %v125 = vunpack.c.l.b16 %v89
    %v126 = vunpack.c.l.b16 %v90
    %v127 = vunpack.c.l.b16 %v91
    %v128 = vunpack.c.l.b16 %v92
    %v129 = vunpack.c.l.b16 %v93
    %v130 = vunpack.c.l.b16 %v94
    %v131 = vunpack.c.l.b16 %v95
    %v132 = vunpack.c.l.b16 %v96
    %v133 = vunpack.c.l.b16 %v97
    %v134 = vunpack.c.l.b16 %v98
    %v135 = vunpack.c.l.b16 %v99
    %v136 = vunpack.c.l.b16 %v100
    %v137 = vpack.c.b16 %v122, %v121
    %v138 = vpack.c.b16 %v124, %v123
    %v139 = vpack.c.b16 %v126, %v125
    %v140 = vpack.c.b16 %v128, %v127
    %v141 = vpack.c.b16 %v130, %v129
    %v142 = vpack.c.b16 %v132, %v131
    %v143 = vpack.c.b16 %v134, %v133
    %v144 = vpack.c.b16 %v136, %v135
    %153 = vmatpush.bf16.msra.mxu0 %v144
    %154 = vmatpush.bf16.msra.mxu0 %v143
    %155 = vmatpush.bf16.msra.mxu0 %v142
    %156 = vmatpush.bf16.msra.mxu0 %v141
    %157 = vmatpush.bf16.msra.mxu0 %v140
    %158 = vmatpush.bf16.msra.mxu0 %v139
    %159 = vmatpush.bf16.msra.mxu0 %v138
    %160 = vmatpush.bf16.msra.mxu0 %v137
    %161 = vmatmul.bf16.gmra.mxu0 %v84
    %v162 = vpop.f32.mrf.mxu0
    %v163 = vadd.f32 %v103, %v162
    %v164 = vpop.f32.mrf.mxu0
    %v165 = vadd.f32 %v103, %v164
    %166 = vdwg.mxu0
    %v167 = vmax.f32 %v163, 0.0
    %v168 = vmax.f32 %v165, 0.0
    %v169 = vpack.c.bf16 %v167, %v167
    %v170 = vpack.c.bf16 %v168, %v168
    %v171 = vld [vmem:[%s5] sm:$0x1]
    %v172 = vunpack.c.l.bf16 %v171
    %v173 = vld [vmem:[#allocation2] sm:$0x1]
    %v174 = vunpack.c.l.bf16 %v169
    %v175 = vunpack.c.l.bf16 %v170
    %v176 = vperm.slane %v172, 0
    %v177 = vmul.f32 %v174, %v176
    %v178 = vmul.f32 %v175, %v176
    %179 = vadd.xlane.f32.xlu0 %v177
    %v180 = vpop.xlane.xlu0 %179
    %181 = vadd.xlane.f32.xlu0 %v178
    %v182 = vpop.xlane.xlu0 %181
    %v184 = vperm.slane %v173, 0
    %v186 = vadd.f32 %v180, %v184
    %v187 = vadd.f32 %v182, %v184
    %vm188 = vcmask 7168
    %189 = vst.msk [vmem:[%s7] sm:$0xff] %vm188, %v186
    %190 = vst.msk [vmem:[%s7 + $0x8] sm:$0xff] %vm188, %v187
    // Predicated region
    $region34: #{discriminator_forward.1} parent=1 // pred_check
      _
    $region35: #{discriminator_forward.1} parent=1 // pred_check_branch
      %192 = sbr.rel (0) target = $region37
    $region36: #{discriminator_forward.1} parent=1 // pred_region
      _
    $region37: #{discriminator_forward.1} parent=1 // pred_fallthru
      _
    // Predicated region
    $region38: #{discriminator_forward.1} parent=1 // pred_check
      _
    $region39: #{discriminator_forward.1} parent=1 // pred_check_branch
      %194 = sbr.rel (0) target = $region41
    $region40: #{discriminator_forward.1} parent=1 // pred_region
      _
    $region41: #{discriminator_forward.1} parent=1 // pred_fallthru
      _
    %195 = vsyncpa [#allocation4], 1

</llo_original>
